<compile_context>
chip_gen: v5e
topology: v5e:2x2
jax: 0.10.0
libtpu: 0.0.40
codegen_flags: <defaults>
</compile_context>

<pallas_src>
import math
from functools import partial

import jax
import jax.numpy as jnp
from jax import lax
from jax.experimental import pallas as pl
from jax.experimental.pallas import tpu as pltpu


_ATTR_NAMES = (
    "aesthetic", "quality", "composition", "color", "dof",
    "light", "content", "contentPreference", "willingToShare",
)
_NUM_HEADS = len(_ATTR_NAMES)   # 9
_HEAD_HIDDEN = 256              # hidden width of both per-head MLPs
_NUM_CLASSES = 4                # classes_heads output width
_OUT_PAD = 128                  # lane-dense padded output width (y | cls | 0s)


def _round_up(x, m):
    return (x + m - 1) // m * m


def _gelu_exact(x):
    # PyTorch nn.GELU (approximate='none'): 0.5 * x * (1 + erf(x / sqrt(2)))
    return 0.5 * x * (1.0 + lax.erf(x * (1.0 / math.sqrt(2.0))))


def _attr_heads_kernel(
    x_ref,                              # (TILE_B, dim)       f32
    a1w_ref, a1b_ref, a2w_ref, a2b_ref, # adapter: dim -> dim//4 -> dim
    hc1w_ref, hc1b_ref,                 # fused head layer 1: dim -> 512
    hc2w_ref, hc2b_ref,                 # fused head layer 2: 512 -> 128 (block-diag)
    out_ref,                            # (1, TILE_B, 128)    f32
):
    x = x_ref[...]                                      # f32 (TILE_B, dim)

    # ---- adapter with residual (elementwise math kept in f32) ----
    a = jnp.dot(x.astype(a1w_ref.dtype), a1w_ref[0],
                preferred_element_type=jnp.float32) + a1b_ref[0]
    a = _gelu_exact(a)
    a = jnp.dot(a.astype(a2w_ref.dtype), a2w_ref[0],
                preferred_element_type=jnp.float32) + a2b_ref[0]
    feat = x + a                                        # f32 (TILE_B, dim)

    # ---- fused heads: one dim->512 matmul, one ReLU ----
    h = jnp.dot(feat.astype(hc1w_ref.dtype), hc1w_ref[0],
                preferred_element_type=jnp.float32) + hc1b_ref[0]
    h = jnp.maximum(h, 0.0)                             # (TILE_B, 512)

    # ---- fused lane-padded output: 512 -> 128 (col 0 = y, cols 1:5 = cls) ----
    out = jnp.dot(h.astype(hc2w_ref.dtype), hc2w_ref[0],
                  preferred_element_type=jnp.float32) + hc2b_ref[0]
    out_ref[0] = out.astype(out_ref.dtype)              # single unmasked store


def multi_attr_pred_head_forward(feature, params, *, matmul_dtype=jnp.float32):
    """feature: (B, dim) f32.  params: stacked per-head weights, see make_params.

    Returns ({attr: (B,1)}, {attr: (B,4)}) matching the PyTorch module output.
    """
    B, dim = feature.shape
    d4 = dim // 4
    H = params["a1_w"].shape[0]
    hh = _HEAD_HIDDEN

    # TODO(synk): if dim is not a multiple of 128, zero-pad dim/d4 once here
    # instead of letting Mosaic mask every lane op (real model dims: 768/1000).

    # ---- batch tiling (multiple of 8 sublanes; 256-512 saturates the MXU) ----
    tile_b = min(512, _round_up(B, 8))
    b_pad = _round_up(B, tile_b)
    if b_pad != B:
        feature = jnp.pad(feature, ((0, b_pad - B), (0, 0)))
    n_btiles = b_pad // tile_b

    # ---- fold / fuse weights (wrapper-side glue, done once per call) ----
    wd = matmul_dtype
    a1_w = params["a1_w"].astype(wd)                                   # (H, dim, d4)
    a2_w = params["a2_w"].astype(wd)                                   # (H, d4, dim)
    hc1_w = jnp.concatenate([params["h1_w"], params["c1_w"]], -1)      # (H, dim, 512)
    hc1_w = hc1_w.astype(wd)
    hc2_w = jnp.zeros((H, 2 * hh, _OUT_PAD), jnp.float32)              # block-diagonal
    hc2_w = hc2_w.at[:, :hh, 0:1].set(params["h2_w"])
    hc2_w = hc2_w.at[:, hh:, 1:1 + _NUM_CLASSES].set(params["c2_w"])
    hc2_w = hc2_w.astype(wd)

    a1_b = params["a1_b"].reshape(H, 1, d4)
    a2_b = params["a2_b"].reshape(H, 1, dim)
    hc1_b = jnp.concatenate([params["h1_b"], params["c1_b"]], -1).reshape(H, 1, 2 * hh)
    hc2_b = jnp.zeros((H, _OUT_PAD), jnp.float32)
    hc2_b = hc2_b.at[:, 0:1].set(params["h2_b"])
    hc2_b = hc2_b.at[:, 1:1 + _NUM_CLASSES].set(params["c2_b"])
    hc2_b = hc2_b.reshape(H, 1, _OUT_PAD)

    # ---- VMEM budget: weights + biases double-buffered + x/out tiles ----
    w_isz = jnp.dtype(wd).itemsize
    w_bytes = (dim * d4 + d4 * dim + dim * 2 * hh + 2 * hh * _OUT_PAD) * w_isz
    b_bytes = (d4 + dim + 2 * hh + _OUT_PAD) * 4
    x_bytes = tile_b * dim * 4
    o_bytes = tile_b * _OUT_PAD * 4
    scratch = 4 * tile_b * max(dim, 2 * hh) * 4          # intermediate vregs/spills
    need = 2 * (w_bytes + b_bytes + x_bytes + o_bytes) + scratch
    vmem_limit = int(min(48 * 1024 * 1024, max(need + (1 << 20), 4 * 1024 * 1024)))

    flops = 2 * b_pad * H * (dim * d4 * 2 + dim * 2 * hh + 2 * hh * _OUT_PAD)
    transc = b_pad * H * d4                               # erf in GELU
    bytes_acc = (H * (w_bytes + b_bytes) + H * b_pad * dim * 4
                 + H * b_pad * _OUT_PAD * 4)

    x_map = lambda b, h: (b, 0)        # x tile stays resident across heads
    w_map = lambda b, h: (h, 0, 0)     # per-head weights stream along head axis
    o_map = lambda b, h: (h, b, 0)

    out = pl.pallas_call(
        _attr_heads_kernel,
        out_shape=jax.ShapeDtypeStruct((H, b_pad, _OUT_PAD), jnp.float32),
        grid=(n_btiles, H),
        in_specs=[
            pl.BlockSpec((tile_b, dim), x_map),
            pl.BlockSpec((1, dim, d4), w_map),
            pl.BlockSpec((1, 1, d4), w_map),
            pl.BlockSpec((1, d4, dim), w_map),
            pl.BlockSpec((1, 1, dim), w_map),
            pl.BlockSpec((1, dim, 2 * hh), w_map),
            pl.BlockSpec((1, 1, 2 * hh), w_map),
            pl.BlockSpec((1, 2 * hh, _OUT_PAD), w_map),
            pl.BlockSpec((1, 1, _OUT_PAD), w_map),
        ],
        out_specs=pl.BlockSpec((1, tile_b, _OUT_PAD), o_map),
        compiler_params=pltpu.CompilerParams(
            dimension_semantics=("parallel", "parallel"),
            vmem_limit_bytes=vmem_limit,
        ),
        cost_estimate=pl.CostEstimate(
            flops=int(flops), transcendentals=int(transc),
            bytes_accessed=int(bytes_acc)),
    )(feature, a1_w, a1_b, a2_w, a2_b, hc1_w, hc1_b, hc2_w, hc2_b)

    out = out[:, :B, :]
    preds = {name: out[i, :, 0:1] for i, name in enumerate(_ATTR_NAMES)}
    clses = {name: out[i, :, 1:1 + _NUM_CLASSES] for i, name in enumerate(_ATTR_NAMES)}
    return preds, clses


def make_params(key, dim, num_heads=_NUM_HEADS):
    """Synthetic per-head params stacked over the 9 heads (shapes match the
    module; PyTorch Linear weights (out,in) are stored transposed as (in,out)).
    Weights: trunc_normal_(std=0.02). Biases are given small nonzero values so
    the self-test exercises the bias / fused-bias-packing paths (the module's
    init sets them to 0, but the forward semantics are init-independent)."""
    d4 = dim // 4
    hh = _HEAD_HIDDEN

    def tn(k, shape):
        return 0.02 * jax.random.truncated_normal(k, -2.0, 2.0, shape, jnp.float32)

    ks = jax.random.split(key, 12)
    return {
        "a1_w": tn(ks[0], (num_heads, dim, d4)),  "a1_b": tn(ks[1], (num_heads, d4)),
        "a2_w": tn(ks[2], (num_heads, d4, dim)),  "a2_b": tn(ks[3], (num_heads, dim)),
        "h1_w": tn(ks[4], (num_heads, dim, hh)),  "h1_b": tn(ks[5], (num_heads, hh)),
        "h2_w": tn(ks[6], (num_heads, hh, 1)),    "h2_b": tn(ks[7], (num_heads, 1)),
        "c1_w": tn(ks[8], (num_heads, dim, hh)),  "c1_b": tn(ks[9], (num_heads, hh)),
        "c2_w": tn(ks[10], (num_heads, hh, _NUM_CLASSES)),
        "c2_b": tn(ks[11], (num_heads, _NUM_CLASSES)),
    }


def reference_forward(feature, params):
    """Pure-JAX (unfused) reference matching the PyTorch module."""
    preds, clses = {}, {}
    for i, name in enumerate(_ATTR_NAMES):
        a = feature @ params["a1_w"][i] + params["a1_b"][i]
        a = jax.nn.gelu(a, approximate=False)
        a = a @ params["a2_w"][i] + params["a2_b"][i]
        feat = feature + a
        h = jnp.maximum(feat @ params["h1_w"][i] + params["h1_b"][i], 0.0)
        preds[name] = h @ params["h2_w"][i] + params["h2_b"][i]
        c = jnp.maximum(feat @ params["c1_w"][i] + params["c1_b"][i], 0.0)
        clses[name] = c @ params["c2_w"][i] + params["c2_b"][i]
    return preds, clses


if __name__ == "__main__":
    key = jax.random.PRNGKey(0)
    k_x, k_p = jax.random.split(key)

    # Small, lane-aligned test shapes (real model uses dim=768 or 1000).
    B, dim = 4, 256
    feature = jax.random.normal(k_x, (B, dim), jnp.float32)
    params = make_params(k_p, dim)

    fwd = jax.jit(multi_attr_pred_head_forward)
    preds, clses = fwd(feature, params)
    preds = jax.block_until_ready(preds)
    clses = jax.block_until_ready(clses)

    ref_preds, ref_clses = reference_forward(feature, params)
    for name in _ATTR_NAMES:
        assert preds[name].shape == (B, 1)
        assert clses[name].shape == (B, _NUM_CLASSES)
        assert jnp.allclose(preds[name], ref_preds[name], atol=1e-4, rtol=1e-4)
        assert jnp.allclose(clses[name], ref_clses[name], atol=1e-4, rtol=1e-4)

    print("KERNEL_OK")
</pallas_src>

<mosaic_0001>
module attributes {stable_mosaic.version = 11 : i64} {
  func.func @_attr_heads_kernel(%arg0: i32, %arg1: i32, %arg2: memref<8x256xf32, #tpu.memory_space<vmem>>, %arg3: memref<1x256x64xf32, #tpu.memory_space<vmem>>, %arg4: memref<1x1x64xf32, #tpu.memory_space<vmem>>, %arg5: memref<1x64x256xf32, #tpu.memory_space<vmem>>, %arg6: memref<1x1x256xf32, #tpu.memory_space<vmem>>, %arg7: memref<1x256x512xf32, #tpu.memory_space<vmem>>, %arg8: memref<1x1x512xf32, #tpu.memory_space<vmem>>, %arg9: memref<1x512x128xf32, #tpu.memory_space<vmem>>, %arg10: memref<1x1x128xf32, #tpu.memory_space<vmem>>, %arg11: memref<1x8x128xf32, #tpu.memory_space<vmem>>) attributes {dimension_semantics = [#tpu.dimension_semantics<parallel>, #tpu.dimension_semantics<parallel>], iteration_bounds = array<i64: 1, 9>, scalar_prefetch = 0 : i64, scratch_operands = 0 : i64, tpu.core_type = #tpu.core_type<tc>, window_params = [{transform_indices = @transform_0, window_bounds = array<i64: 8, 256>}, {transform_indices = @transform_1, window_bounds = array<i64: 1, 256, 64>}, {transform_indices = @transform_2, window_bounds = array<i64: 1, 1, 64>}, {transform_indices = @transform_3, window_bounds = array<i64: 1, 64, 256>}, {transform_indices = @transform_4, window_bounds = array<i64: 1, 1, 256>}, {transform_indices = @transform_5, window_bounds = array<i64: 1, 256, 512>}, {transform_indices = @transform_6, window_bounds = array<i64: 1, 1, 512>}, {transform_indices = @transform_7, window_bounds = array<i64: 1, 512, 128>}, {transform_indices = @transform_8, window_bounds = array<i64: 1, 1, 128>}, {transform_indices = @transform_9, window_bounds = array<i64: 1, 8, 128>}]} {
    %c0 = arith.constant 0 : index
    %c0_0 = arith.constant 0 : index
    %0 = vector.load %arg2[%c0, %c0_0] : memref<8x256xf32, #tpu.memory_space<vmem>>, vector<8x256xf32>
    %c0_1 = arith.constant 0 : index
    %c0_2 = arith.constant 0 : index
    %c0_3 = arith.constant 0 : index
    %1 = vector.load %arg3[%c0_1, %c0_2, %c0_3] : memref<1x256x64xf32, #tpu.memory_space<vmem>>, vector<1x256x64xf32>
    %2 = vector.shape_cast %1 : vector<1x256x64xf32> to vector<256x64xf32>
    %cst = arith.constant dense<0.000000e+00> : vector<8x64xf32>
    %3 = tpu.matmul %0, %2, %cst {dimension_numbers = #tpu.dot_dimension_numbers<[1], [0], [0], [1], [0, 0, 1, 1], [], []>} : vector<8x256xf32>, vector<256x64xf32>, vector<8x64xf32> -> vector<8x64xf32>
    %c0_4 = arith.constant 0 : index
    %c0_5 = arith.constant 0 : index
    %c0_6 = arith.constant 0 : index
    %4 = vector.load %arg4[%c0_4, %c0_5, %c0_6] : memref<1x1x64xf32, #tpu.memory_space<vmem>>, vector<1x1x64xf32>
    %5 = vector.shape_cast %4 : vector<1x1x64xf32> to vector<1x64xf32>
    %6 = vector.broadcast %5 : vector<1x64xf32> to vector<8x64xf32>
    %7 = arith.addf %3, %6 : vector<8x64xf32>
    %cst_7 = arith.constant 5.000000e-01 : f32
    %8 = vector.broadcast %cst_7 : f32 to vector<8x64xf32>
    %9 = arith.mulf %8, %7 : vector<8x64xf32>
    %cst_8 = arith.constant 0.707106769 : f32
    %10 = vector.broadcast %cst_8 : f32 to vector<8x64xf32>
    %11 = arith.mulf %7, %10 : vector<8x64xf32>
    %12 = math.erf %11 : vector<8x64xf32>
    %cst_9 = arith.constant 1.000000e+00 : f32
    %13 = vector.broadcast %cst_9 : f32 to vector<8x64xf32>
    %14 = arith.addf %13, %12 : vector<8x64xf32>
    %15 = arith.mulf %9, %14 : vector<8x64xf32>
    %c0_10 = arith.constant 0 : index
    %c0_11 = arith.constant 0 : index
    %c0_12 = arith.constant 0 : index
    %16 = vector.load %arg5[%c0_10, %c0_11, %c0_12] : memref<1x64x256xf32, #tpu.memory_space<vmem>>, vector<1x64x256xf32>
    %17 = vector.shape_cast %16 : vector<1x64x256xf32> to vector<64x256xf32>
    %cst_13 = arith.constant dense<0.000000e+00> : vector<8x256xf32>
    %18 = tpu.matmul %15, %17, %cst_13 {dimension_numbers = #tpu.dot_dimension_numbers<[1], [0], [0], [1], [0, 0, 1, 1], [], []>} : vector<8x64xf32>, vector<64x256xf32>, vector<8x256xf32> -> vector<8x256xf32>
    %c0_14 = arith.constant 0 : index
    %c0_15 = arith.constant 0 : index
    %c0_16 = arith.constant 0 : index
    %19 = vector.load %arg6[%c0_14, %c0_15, %c0_16] : memref<1x1x256xf32, #tpu.memory_space<vmem>>, vector<1x1x256xf32>
    %20 = vector.shape_cast %19 : vector<1x1x256xf32> to vector<1x256xf32>
    %21 = vector.broadcast %20 : vector<1x256xf32> to vector<8x256xf32>
    %22 = arith.addf %18, %21 : vector<8x256xf32>
    %23 = arith.addf %0, %22 : vector<8x256xf32>
    %c0_17 = arith.constant 0 : index
    %c0_18 = arith.constant 0 : index
    %c0_19 = arith.constant 0 : index
    %24 = vector.load %arg7[%c0_17, %c0_18, %c0_19] : memref<1x256x512xf32, #tpu.memory_space<vmem>>, vector<1x256x512xf32>
    %25 = vector.shape_cast %24 : vector<1x256x512xf32> to vector<256x512xf32>
    %cst_20 = arith.constant dense<0.000000e+00> : vector<8x512xf32>
    %26 = tpu.matmul %23, %25, %cst_20 {dimension_numbers = #tpu.dot_dimension_numbers<[1], [0], [0], [1], [0, 0, 1, 1], [], []>} : vector<8x256xf32>, vector<256x512xf32>, vector<8x512xf32> -> vector<8x512xf32>
    %c0_21 = arith.constant 0 : index
    %c0_22 = arith.constant 0 : index
    %c0_23 = arith.constant 0 : index
    %27 = vector.load %arg8[%c0_21, %c0_22, %c0_23] : memref<1x1x512xf32, #tpu.memory_space<vmem>>, vector<1x1x512xf32>
    %28 = vector.shape_cast %27 : vector<1x1x512xf32> to vector<1x512xf32>
    %29 = vector.broadcast %28 : vector<1x512xf32> to vector<8x512xf32>
    %30 = arith.addf %26, %29 : vector<8x512xf32>
    %cst_24 = arith.constant 0.000000e+00 : f32
    %31 = vector.broadcast %cst_24 : f32 to vector<8x512xf32>
    %32 = arith.maximumf %30, %31 : vector<8x512xf32>
    %c0_25 = arith.constant 0 : index
    %c0_26 = arith.constant 0 : index
    %c0_27 = arith.constant 0 : index
    %33 = vector.load %arg9[%c0_25, %c0_26, %c0_27] : memref<1x512x128xf32, #tpu.memory_space<vmem>>, vector<1x512x128xf32>
    %34 = vector.shape_cast %33 : vector<1x512x128xf32> to vector<512x128xf32>
    %cst_28 = arith.constant dense<0.000000e+00> : vector<8x128xf32>
    %35 = tpu.matmul %32, %34, %cst_28 {dimension_numbers = #tpu.dot_dimension_numbers<[1], [0], [0], [1], [0, 0, 1, 1], [], []>} : vector<8x512xf32>, vector<512x128xf32>, vector<8x128xf32> -> vector<8x128xf32>
    %c0_29 = arith.constant 0 : index
    %c0_30 = arith.constant 0 : index
    %c0_31 = arith.constant 0 : index
    %36 = vector.load %arg10[%c0_29, %c0_30, %c0_31] : memref<1x1x128xf32, #tpu.memory_space<vmem>>, vector<1x1x128xf32>
    %37 = vector.shape_cast %36 : vector<1x1x128xf32> to vector<1x128xf32>
    %38 = vector.broadcast %37 : vector<1x128xf32> to vector<8x128xf32>
    %39 = arith.addf %35, %38 : vector<8x128xf32>
    %c0_32 = arith.constant 0 : index
    %c0_33 = arith.constant 0 : index
    %c0_34 = arith.constant 0 : index
    %40 = vector.load %arg11[%c0_32, %c0_33, %c0_34] : memref<1x8x128xf32, #tpu.memory_space<vmem>>, vector<1x8x128xf32>
    %41 = vector.shape_cast %40 : vector<1x8x128xf32> to vector<8x128xf32>
    %42 = vector.shape_cast %39 : vector<8x128xf32> to vector<1x8x128xf32>
    tpu.vector_store %arg11[%c0_32, %c0_33, %c0_34], %42 {strides = array<i32>} : memref<1x8x128xf32, #tpu.memory_space<vmem>>, vector<1x8x128xf32>,
    return
  }
  func.func @transform_0(%arg0: i32, %arg1: i32) -> (i32, i32) {
    %c0_i32 = arith.constant 0 : i32
    %c0_i32_0 = arith.constant 0 : i32
    return %arg0, %c0_i32 : i32, i32
  }
  func.func @transform_1(%arg0: i32, %arg1: i32) -> (i32, i32, i32) {
    %c0_i32 = arith.constant 0 : i32
    %c0_i32_0 = arith.constant 0 : i32
    %c0_i32_1 = arith.constant 0 : i32
    return %arg1, %c0_i32, %c0_i32_0 : i32, i32, i32
  }
  func.func @transform_2(%arg0: i32, %arg1: i32) -> (i32, i32, i32) {
    %c0_i32 = arith.constant 0 : i32
    %c0_i32_0 = arith.constant 0 : i32
    %c0_i32_1 = arith.constant 0 : i32
    return %arg1, %c0_i32, %c0_i32_0 : i32, i32, i32
  }
  func.func @transform_3(%arg0: i32, %arg1: i32) -> (i32, i32, i32) {
    %c0_i32 = arith.constant 0 : i32
    %c0_i32_0 = arith.constant 0 : i32
    %c0_i32_1 = arith.constant 0 : i32
    return %arg1, %c0_i32, %c0_i32_0 : i32, i32, i32
  }
  func.func @transform_4(%arg0: i32, %arg1: i32) -> (i32, i32, i32) {
    %c0_i32 = arith.constant 0 : i32
    %c0_i32_0 = arith.constant 0 : i32
    %c0_i32_1 = arith.constant 0 : i32
    return %arg1, %c0_i32, %c0_i32_0 : i32, i32, i32
  }
  func.func @transform_5(%arg0: i32, %arg1: i32) -> (i32, i32, i32) {
    %c0_i32 = arith.constant 0 : i32
    %c0_i32_0 = arith.constant 0 : i32
    %c0_i32_1 = arith.constant 0 : i32
    return %arg1, %c0_i32, %c0_i32_0 : i32, i32, i32
  }
  func.func @transform_6(%arg0: i32, %arg1: i32) -> (i32, i32, i32) {
    %c0_i32 = arith.constant 0 : i32
    %c0_i32_0 = arith.constant 0 : i32
    %c0_i32_1 = arith.constant 0 : i32
    return %arg1, %c0_i32, %c0_i32_0 : i32, i32, i32
  }
  func.func @transform_7(%arg0: i32, %arg1: i32) -> (i32, i32, i32) {
    %c0_i32 = arith.constant 0 : i32
    %c0_i32_0 = arith.constant 0 : i32
    %c0_i32_1 = arith.constant 0 : i32
    return %arg1, %c0_i32, %c0_i32_0 : i32, i32, i32
  }
  func.func @transform_8(%arg0: i32, %arg1: i32) -> (i32, i32, i32) {
    %c0_i32 = arith.constant 0 : i32
    %c0_i32_0 = arith.constant 0 : i32
    %c0_i32_1 = arith.constant 0 : i32
    return %arg1, %c0_i32, %c0_i32_0 : i32, i32, i32
  }
  func.func @transform_9(%arg0: i32, %arg1: i32) -> (i32, i32, i32) {
    %c0_i32 = arith.constant 0 : i32
    %c0_i32_0 = arith.constant 0 : i32
    return %arg1, %arg0, %c0_i32 : i32, i32, i32
  }
}

</mosaic_0001>

<llo_original>
// kernel: multi_attr_pred_head_forward.1
$region0: #{multi_attr_pred_head_forward.1}
  #allocation0 [shape = 'u32[]', space=smem, size = 0x4, offset = 0x4, fixed_abs, tag = 'smem constant byte address 0x4 - core index']
  #allocation1 [shape = 'u32[72,128]{1,0:T(1,128)}', space=vmem, size = 0x9000, scoped, tag = 'internal scratch']
  %s0 = inlined_call_operand.vmem [shape: f32[8,256], index: 0, kind: input, shape index: {}]
  %s1 = inlined_call_operand.vmem [shape: f32[9,256,64], index: 1, kind: input, shape index: {}]
  %s2 = inlined_call_operand.vmem [shape: f32[9,1,64], index: 2, kind: input, shape index: {}]
  %s3 = inlined_call_operand.vmem [shape: f32[9,64,256], index: 3, kind: input, shape index: {}]
  %s4 = inlined_call_operand.vmem [shape: f32[9,1,256], index: 4, kind: input, shape index: {}]
  %s5 = inlined_call_operand.vmem [shape: f32[9,256,512], index: 5, kind: input, shape index: {}]
  %s6 = inlined_call_operand.vmem [shape: f32[9,1,512], index: 6, kind: input, shape index: {}]
  %s7 = inlined_call_operand.vmem [shape: f32[9,512,128], index: 7, kind: input, shape index: {}]
  %s8 = inlined_call_operand.vmem [shape: f32[9,1,128], index: 8, kind: input, shape index: {}]
  %s9 = inlined_call_operand.vmem [shape: f32[9,8,128], index: 9, kind: output, shape index: {}]
  %s10 = sld [smem:[#allocation0]]
  $region69: #{multi_attr_pred_head_forward.1} parent=0
    _
  %s12 = ssub.s32 1, %s10
  %s13 = scalar_select 0, %s12, %s10
  loop: start=0, step=1, limit=11
  $region2: #{multi_attr_pred_head_forward.1} parent=0 // loop_pre_header
    _
  $region3: #{multi_attr_pred_head_forward.1} parent=0 // loop_header
    %s15 = sphi 0, %s19
    %p16 = scmp.ge.s32.totalorder %s15, 11
    %s22 = sphi 0, %s34
    %s23 = sphi 0, %s30
    %s24 = sphi 0, %s22
    %s25 = sphi 0, %s23
    %s26 = sphi 0, %s24
    %s27 = sphi 0, %s25
    %s37 = sphi 0, %s39
    %s40 = sphi 0, %s37
    %s41 = sphi 0, %s40
    %s57 = sphi 0, %s41
    %s63 = sphi 0, %s65
    %s66 = sphi 0, %s63
    %s67 = sphi 0, %s66
    %s83 = sphi 0, %s67
    %s89 = sphi 0, %s91
    %s92 = sphi 0, %s89
    %s93 = sphi 0, %s92
    %s109 = sphi 0, %s93
    %s115 = sphi 0, %s117
    %s118 = sphi 0, %s115
    %s119 = sphi 0, %s118
    %s135 = sphi 0, %s119
    %s141 = sphi 0, %s143
    %s144 = sphi 0, %s141
    %s145 = sphi 0, %s144
    %s161 = sphi 0, %s145
    %s167 = sphi 0, %s169
    %s170 = sphi 0, %s167
    %s171 = sphi 0, %s170
    %s187 = sphi 0, %s171
    %s193 = sphi 0, %s195
    %s196 = sphi 0, %s193
    %s197 = sphi 0, %s196
    %s213 = sphi 0, %s197
    %s219 = sphi 0, %s221
    %s222 = sphi 0, %s219
    %s223 = sphi 0, %s222
    %s239 = sphi 0, %s223
    %s245 = sphi 0, %s247
    %s248 = sphi 0, %s245
    %s249 = sphi 0, %s248
    %s265 = sphi 0, %s249
    %s273 = sphi 0, %s275
    %s276 = sphi 0, %s273
    %s277 = sphi 0, %s276
    %s293 = sphi 0, %s277
  $region4: #{multi_attr_pred_head_forward.1} parent=0 // loop_header_branch
    %18 = sbr.rel (%p16) target = $region8
  $region5: #{multi_attr_pred_head_forward.1} parent=0 // loop_body
    %s20 = ssub.s32 %s15, 1
    %s21 = ssub.s32 %s15, 2
    %s28 = sadd.s32 1, %s23
    %p29 = scmp.ge.s32.totalorder %s28, 9
    %s30 = scalar_select %p29, 0, %s28
    %s31 = sadd.s32 1, %s22
    %s32 = scalar_select %p29, %s31, %s22
    %p33 = scmp.ge.s32.totalorder %s32, 1
    %s34 = scalar_select %p33, 0, %s32
    %s35 = ssub.s32 %s22, %s34
    %p36 = scmp.eq.s32.totalorder %s35, 0
    %s38 = sadd.s32 %s37, 1
    %s39 = scalar_select %p36, %s37, %s38
    %p42 = pneg %p36
    %p43 = scmp.eq.s32.totalorder %s15, 8
    %p44 = por %p42, %p43
    %p45 = scmp.ne.s32.totalorder %s37, %s40
    %p46 = scmp.eq.s32.totalorder %s15, 0
    %p47 = por %p45, %p46
    %p48 = scmp.ne.s32.totalorder %s37, %s40
    %p49 = scmp.eq.s32.totalorder %s20, 8
    %p50 = por %p48, %p49
    %p51 = scmp.ne.s32.totalorder %s40, %s41
    %p52 = scmp.eq.s32.totalorder %s20, 0
    %p53 = por %p51, %p52
    %p54 = scmp.ne.s32.totalorder %s40, %s41
    %p55 = scmp.eq.s32.totalorder %s21, 8
    %p56 = por %p54, %p55
    %p58 = scmp.ne.s32.totalorder %s41, %s57
    %p59 = scmp.eq.s32.totalorder %s21, 0
    %p60 = por %p58, %p59
    %s61 = ssub.s32 %s23, %s30
    %p62 = scmp.eq.s32.totalorder %s61, 0
    %s64 = sadd.s32 %s63, 1
    %s65 = scalar_select %p62, %s63, %s64
    %p68 = pneg %p62
    %p69 = scmp.eq.s32.totalorder %s15, 8
    %p70 = por %p68, %p69
    %p71 = scmp.ne.s32.totalorder %s63, %s66
    %p72 = scmp.eq.s32.totalorder %s15, 0
    %p73 = por %p71, %p72
    %p74 = scmp.ne.s32.totalorder %s63, %s66
    %p75 = scmp.eq.s32.totalorder %s20, 8
    %p76 = por %p74, %p75
    %p77 = scmp.ne.s32.totalorder %s66, %s67
    %p78 = scmp.eq.s32.totalorder %s20, 0
    %p79 = por %p77, %p78
    %p80 = scmp.ne.s32.totalorder %s66, %s67
    %p81 = scmp.eq.s32.totalorder %s21, 8
    %p82 = por %p80, %p81
    %p84 = scmp.ne.s32.totalorder %s67, %s83
    %p85 = scmp.eq.s32.totalorder %s21, 0
    %p86 = por %p84, %p85
    %s87 = ssub.s32 %s23, %s30
    %p88 = scmp.eq.s32.totalorder %s87, 0
    %s90 = sadd.s32 %s89, 1
    %s91 = scalar_select %p88, %s89, %s90
    %p94 = pneg %p88
    %p95 = scmp.eq.s32.totalorder %s15, 8
    %p96 = por %p94, %p95
    %p97 = scmp.ne.s32.totalorder %s89, %s92
    %p98 = scmp.eq.s32.totalorder %s15, 0
    %p99 = por %p97, %p98
    %p100 = scmp.ne.s32.totalorder %s89, %s92
    %p101 = scmp.eq.s32.totalorder %s20, 8
    %p102 = por %p100, %p101
    %p103 = scmp.ne.s32.totalorder %s92, %s93
    %p104 = scmp.eq.s32.totalorder %s20, 0
    %p105 = por %p103, %p104
    %p106 = scmp.ne.s32.totalorder %s92, %s93
    %p107 = scmp.eq.s32.totalorder %s21, 8
    %p108 = por %p106, %p107
    %p110 = scmp.ne.s32.totalorder %s93, %s109
    %p111 = scmp.eq.s32.totalorder %s21, 0
    %p112 = por %p110, %p111
    %s113 = ssub.s32 %s23, %s30
    %p114 = scmp.eq.s32.totalorder %s113, 0
    %s116 = sadd.s32 %s115, 1
    %s117 = scalar_select %p114, %s115, %s116
    %p120 = pneg %p114
    %p121 = scmp.eq.s32.totalorder %s15, 8
    %p122 = por %p120, %p121
    %p123 = scmp.ne.s32.totalorder %s115, %s118
    %p124 = scmp.eq.s32.totalorder %s15, 0
    %p125 = por %p123, %p124
    %p126 = scmp.ne.s32.totalorder %s115, %s118
    %p127 = scmp.eq.s32.totalorder %s20, 8
    %p128 = por %p126, %p127
    %p129 = scmp.ne.s32.totalorder %s118, %s119
    %p130 = scmp.eq.s32.totalorder %s20, 0
    %p131 = por %p129, %p130
    %p132 = scmp.ne.s32.totalorder %s118, %s119
    %p133 = scmp.eq.s32.totalorder %s21, 8
    %p134 = por %p132, %p133
    %p136 = scmp.ne.s32.totalorder %s119, %s135
    %p137 = scmp.eq.s32.totalorder %s21, 0
    %p138 = por %p136, %p137
    %s139 = ssub.s32 %s23, %s30
    %p140 = scmp.eq.s32.totalorder %s139, 0
    %s142 = sadd.s32 %s141, 1
    %s143 = scalar_select %p140, %s141, %s142
    %p146 = pneg %p140
    %p147 = scmp.eq.s32.totalorder %s15, 8
    %p148 = por %p146, %p147
    %p149 = scmp.ne.s32.totalorder %s141, %s144
    %p150 = scmp.eq.s32.totalorder %s15, 0
    %p151 = por %p149, %p150
    %p152 = scmp.ne.s32.totalorder %s141, %s144
    %p153 = scmp.eq.s32.totalorder %s20, 8
    %p154 = por %p152, %p153
    %p155 = scmp.ne.s32.totalorder %s144, %s145
    %p156 = scmp.eq.s32.totalorder %s20, 0
    %p157 = por %p155, %p156
    %p158 = scmp.ne.s32.totalorder %s144, %s145
    %p159 = scmp.eq.s32.totalorder %s21, 8
    %p160 = por %p158, %p159
    %p162 = scmp.ne.s32.totalorder %s145, %s161
    %p163 = scmp.eq.s32.totalorder %s21, 0
    %p164 = por %p162, %p163
    %s165 = ssub.s32 %s23, %s30
    %p166 = scmp.eq.s32.totalorder %s165, 0
    %s168 = sadd.s32 %s167, 1
    %s169 = scalar_select %p166, %s167, %s168
    %p172 = pneg %p166
    %p173 = scmp.eq.s32.totalorder %s15, 8
    %p174 = por %p172, %p173
    %p175 = scmp.ne.s32.totalorder %s167, %s170
    %p176 = scmp.eq.s32.totalorder %s15, 0
    %p177 = por %p175, %p176
    %p178 = scmp.ne.s32.totalorder %s167, %s170
    %p179 = scmp.eq.s32.totalorder %s20, 8
    %p180 = por %p178, %p179
    %p181 = scmp.ne.s32.totalorder %s170, %s171
    %p182 = scmp.eq.s32.totalorder %s20, 0
    %p183 = por %p181, %p182
    %p184 = scmp.ne.s32.totalorder %s170, %s171
    %p185 = scmp.eq.s32.totalorder %s21, 8
    %p186 = por %p184, %p185
    %p188 = scmp.ne.s32.totalorder %s171, %s187
    %p189 = scmp.eq.s32.totalorder %s21, 0
    %p190 = por %p188, %p189
    %s191 = ssub.s32 %s23, %s30
    %p192 = scmp.eq.s32.totalorder %s191, 0
    %s194 = sadd.s32 %s193, 1
    %s195 = scalar_select %p192, %s193, %s194
    %p198 = pneg %p192
    %p199 = scmp.eq.s32.totalorder %s15, 8
    %p200 = por %p198, %p199
    %p201 = scmp.ne.s32.totalorder %s193, %s196
    %p202 = scmp.eq.s32.totalorder %s15, 0
    %p203 = por %p201, %p202
    %p204 = scmp.ne.s32.totalorder %s193, %s196
    %p205 = scmp.eq.s32.totalorder %s20, 8
    %p206 = por %p204, %p205
    %p207 = scmp.ne.s32.totalorder %s196, %s197
    %p208 = scmp.eq.s32.totalorder %s20, 0
    %p209 = por %p207, %p208
    %p210 = scmp.ne.s32.totalorder %s196, %s197
    %p211 = scmp.eq.s32.totalorder %s21, 8
    %p212 = por %p210, %p211
    %p214 = scmp.ne.s32.totalorder %s197, %s213
    %p215 = scmp.eq.s32.totalorder %s21, 0
    %p216 = por %p214, %p215
    %s217 = ssub.s32 %s23, %s30
    %p218 = scmp.eq.s32.totalorder %s217, 0
    %s220 = sadd.s32 %s219, 1
    %s221 = scalar_select %p218, %s219, %s220
    %p224 = pneg %p218
    %p225 = scmp.eq.s32.totalorder %s15, 8
    %p226 = por %p224, %p225
    %p227 = scmp.ne.s32.totalorder %s219, %s222
    %p228 = scmp.eq.s32.totalorder %s15, 0
    %p229 = por %p227, %p228
    %p230 = scmp.ne.s32.totalorder %s219, %s222
    %p231 = scmp.eq.s32.totalorder %s20, 8
    %p232 = por %p230, %p231
    %p233 = scmp.ne.s32.totalorder %s222, %s223
    %p234 = scmp.eq.s32.totalorder %s20, 0
    %p235 = por %p233, %p234
    %p236 = scmp.ne.s32.totalorder %s222, %s223
    %p237 = scmp.eq.s32.totalorder %s21, 8
    %p238 = por %p236, %p237
    %p240 = scmp.ne.s32.totalorder %s223, %s239
    %p241 = scmp.eq.s32.totalorder %s21, 0
    %p242 = por %p240, %p241
    %s243 = ssub.s32 %s23, %s30
    %p244 = scmp.eq.s32.totalorder %s243, 0
    %s246 = sadd.s32 %s245, 1
    %s247 = scalar_select %p244, %s245, %s246
    %p250 = pneg %p244
    %p251 = scmp.eq.s32.totalorder %s15, 8
    %p252 = por %p250, %p251
    %p253 = scmp.ne.s32.totalorder %s245, %s248
    %p254 = scmp.eq.s32.totalorder %s15, 0
    %p255 = por %p253, %p254
    %p256 = scmp.ne.s32.totalorder %s245, %s248
    %p257 = scmp.eq.s32.totalorder %s20, 8
    %p258 = por %p256, %p257
    %p259 = scmp.ne.s32.totalorder %s248, %s249
    %p260 = scmp.eq.s32.totalorder %s20, 0
    %p261 = por %p259, %p260
    %p262 = scmp.ne.s32.totalorder %s248, %s249
    %p263 = scmp.eq.s32.totalorder %s21, 8
    %p264 = por %p262, %p263
    %p266 = scmp.ne.s32.totalorder %s249, %s265
    %p267 = scmp.eq.s32.totalorder %s21, 0
    %p268 = por %p266, %p267
    %s269 = ssub.s32 %s23, %s30
    %s270 = ssub.s32 %s22, %s34
    %s271 = sor.u32 %s269, %s270
    %p272 = scmp.eq.s32.totalorder %s271, 0
    %s274 = sadd.s32 %s273, 1
    %s275 = scalar_select %p272, %s273, %s274
    %p278 = pneg %p272
    %p279 = scmp.eq.s32.totalorder %s15, 8
    %p280 = por %p278, %p279
    %p281 = scmp.ne.s32.totalorder %s273, %s276
    %p282 = scmp.eq.s32.totalorder %s15, 0
    %p283 = por %p281, %p282
    %p284 = scmp.ne.s32.totalorder %s273, %s276
    %p285 = scmp.eq.s32.totalorder %s20, 8
    %p286 = por %p284, %p285
    %p287 = scmp.ne.s32.totalorder %s276, %s277
    %p288 = scmp.eq.s32.totalorder %s20, 0
    %p289 = por %p287, %p288
    %p290 = scmp.ne.s32.totalorder %s276, %s277
    %p291 = scmp.eq.s32.totalorder %s21, 8
    %p292 = por %p290, %p291
    %p294 = scmp.ne.s32.totalorder %s277, %s293
    %p295 = scmp.eq.s32.totalorder %s21, 0
    %p296 = por %p294, %p295
    %p297 = scmp.le.s32.totalorder 1, %s15
    %p298 = scmp.lt.s32.totalorder %s15, 10
    %p299 = pnand %p297, %p298
    %p300 = pneg %p299
    // Predicated region
    $region9: #{multi_attr_pred_head_forward.1} parent=5 // pred_check
      _
    $region10: #{multi_attr_pred_head_forward.1} parent=5 // pred_check_branch
      %302 = sbr.rel (%p299) target = $region12
    $region11: #{multi_attr_pred_head_forward.1} parent=5 // pred_region
      %s303 = ssub.s32 %s15, 1
      // Predicated region
      $region13: #{multi_attr_pred_head_forward.1} parent=11 // pred_check
        %p304 = pneg %p53
      $region14: #{multi_attr_pred_head_forward.1} parent=11 // pred_check_branch
        %306 = sbr.rel (%p304) target = $region16
      $region15: #{multi_attr_pred_head_forward.1} parent=11 // pred_region
        %p307 = scmp.lt.s32.totalorder %s24, 0
        %s308 = scalar_select %p307, %s24, 0
        %s309 = smul.addr %s308, 2
        %s310 = smul.addr %s309, 8
        %s311 = scalar_lea.vmem %s0, %s310
      $region16: #{multi_attr_pred_head_forward.1} parent=11 // pred_fallthru
        _
    $region12: #{multi_attr_pred_head_forward.1} parent=5 // pred_fallthru
      _
    %p312 = scmp.lt.s32.totalorder %s15, 9
    // Predicated region
    $region17: #{multi_attr_pred_head_forward.1} parent=5 // pred_check
      %p313 = pneg %p312
    $region18: #{multi_attr_pred_head_forward.1} parent=5 // pred_check_branch
      %315 = sbr.rel (%p313) target = $region20
    $region19: #{multi_attr_pred_head_forward.1} parent=5 // pred_region
      // Predicated region
      $region21: #{multi_attr_pred_head_forward.1} parent=19 // pred_check
        %p316 = pneg %p73
      $region22: #{multi_attr_pred_head_forward.1} parent=19 // pred_check_branch
        %318 = sbr.rel (%p316) target = $region24
      $region23: #{multi_attr_pred_head_forward.1} parent=19 // pred_region
        %p319 = scmp.lt.s32.totalorder %s23, 8
        %s320 = scalar_select %p319, %s23, 8
        %s321 = smul.addr %s320, 32
        %s322 = smul.addr %s321, 8
        %s323 = scalar_lea.vmem %s1, %s322
      $region24: #{multi_attr_pred_head_forward.1} parent=19 // pred_fallthru
        _
      // Predicated region
      $region25: #{multi_attr_pred_head_forward.1} parent=19 // pred_check
        %p324 = pneg %p99
      $region26: #{multi_attr_pred_head_forward.1} parent=19 // pred_check_branch
        %326 = sbr.rel (%p324) target = $region28
      $region27: #{multi_attr_pred_head_forward.1} parent=19 // pred_region
        %p327 = scmp.lt.s32.totalorder %s23, 8
        %s328 = scalar_select %p327, %s23, 8
        %s329 = scalar_lea.vmem %s2, %s328
      $region28: #{multi_attr_pred_head_forward.1} parent=19 // pred_fallthru
        _
      // Predicated region
      $region29: #{multi_attr_pred_head_forward.1} parent=19 // pred_check
        %p330 = pneg %p125
      $region30: #{multi_attr_pred_head_forward.1} parent=19 // pred_check_branch
        %332 = sbr.rel (%p330) target = $region32
      $region31: #{multi_attr_pred_head_forward.1} parent=19 // pred_region
        %p333 = scmp.lt.s32.totalorder %s23, 8
        %s334 = scalar_select %p333, %s23, 8
        %s335 = smul.addr %s334, 16
        %s336 = smul.addr %s335, 8
        %s337 = scalar_lea.vmem %s3, %s336
      $region32: #{multi_attr_pred_head_forward.1} parent=19 // pred_fallthru
        _
      // Predicated region
      $region33: #{multi_attr_pred_head_forward.1} parent=19 // pred_check
        %p338 = pneg %p151
      $region34: #{multi_attr_pred_head_forward.1} parent=19 // pred_check_branch
        %340 = sbr.rel (%p338) target = $region36
      $region35: #{multi_attr_pred_head_forward.1} parent=19 // pred_region
        %p341 = scmp.lt.s32.totalorder %s23, 8
        %s342 = scalar_select %p341, %s23, 8
        %s343 = smul.addr %s342, 2
        %s344 = scalar_lea.vmem %s4, %s343
      $region36: #{multi_attr_pred_head_forward.1} parent=19 // pred_fallthru
        _
      // Predicated region
      $region37: #{multi_attr_pred_head_forward.1} parent=19 // pred_check
        %p345 = pneg %p177
      $region38: #{multi_attr_pred_head_forward.1} parent=19 // pred_check_branch
        %347 = sbr.rel (%p345) target = $region40
      $region39: #{multi_attr_pred_head_forward.1} parent=19 // pred_region
        %p348 = scmp.lt.s32.totalorder %s23, 8
        %s349 = scalar_select %p348, %s23, 8
        %s350 = smul.addr %s349, 128
        %s351 = smul.addr %s350, 8
        %s352 = scalar_lea.vmem %s5, %s351
      $region40: #{multi_attr_pred_head_forward.1} parent=19 // pred_fallthru
        _
      // Predicated region
      $region41: #{multi_attr_pred_head_forward.1} parent=19 // pred_check
        %p353 = pneg %p203
      $region42: #{multi_attr_pred_head_forward.1} parent=19 // pred_check_branch
        %355 = sbr.rel (%p353) target = $region44
      $region43: #{multi_attr_pred_head_forward.1} parent=19 // pred_region
        %p356 = scmp.lt.s32.totalorder %s23, 8
        %s357 = scalar_select %p356, %s23, 8
        %s358 = smul.addr %s357, 4
        %s359 = scalar_lea.vmem %s6, %s358
      $region44: #{multi_attr_pred_head_forward.1} parent=19 // pred_fallthru
        _
      // Predicated region
      $region45: #{multi_attr_pred_head_forward.1} parent=19 // pred_check
        %p360 = pneg %p229
      $region46: #{multi_attr_pred_head_forward.1} parent=19 // pred_check_branch
        %362 = sbr.rel (%p360) target = $region48
      $region47: #{multi_attr_pred_head_forward.1} parent=19 // pred_region
        %p363 = scmp.lt.s32.totalorder %s23, 8
        %s364 = scalar_select %p363, %s23, 8
        %s365 = smul.addr %s364, 64
        %s366 = smul.addr %s365, 8
        %s367 = scalar_lea.vmem %s7, %s366
      $region48: #{multi_attr_pred_head_forward.1} parent=19 // pred_fallthru
        _
      // Predicated region
      $region49: #{multi_attr_pred_head_forward.1} parent=19 // pred_check
        %p368 = pneg %p255
      $region50: #{multi_attr_pred_head_forward.1} parent=19 // pred_check_branch
        %370 = sbr.rel (%p368) target = $region52
      $region51: #{multi_attr_pred_head_forward.1} parent=19 // pred_region
        %p371 = scmp.lt.s32.totalorder %s23, 8
        %s372 = scalar_select %p371, %s23, 8
        %s373 = scalar_lea.vmem %s8, %s372
      $region52: #{multi_attr_pred_head_forward.1} parent=19 // pred_fallthru
        _
    $region20: #{multi_attr_pred_head_forward.1} parent=5 // pred_fallthru
      _
    %p374 = scmp.le.s32.totalorder 1, %s15
    %p375 = scmp.lt.s32.totalorder %s15, 10
    %p376 = pnand %p374, %p375
    %p377 = pneg %p376
    // Predicated region
    $region53: #{multi_attr_pred_head_forward.1} parent=5 // pred_check
      _
    $region54: #{multi_attr_pred_head_forward.1} parent=5 // pred_check_branch
      %379 = sbr.rel (%p376) target = $region56
    $region55: #{multi_attr_pred_head_forward.1} parent=5 // pred_region
      %s380 = ssub.s32 %s15, 1
      %p381 = scmp.lt.s32.totalorder %s24, 0
      %s382 = scalar_select %p381, %s24, 0
      %s383 = smul.addr %s382, 2
      %s384 = smul.addr %s383, 8
      %s385 = scalar_lea.vmem %s0, %s384
      %p386 = pneg %p53
      %p387 = pneg %p50
      %p388 = scmp.lt.s32.totalorder %s25, 8
      %s389 = scalar_select %p388, %s25, 8
      %s390 = smul.addr %s389, 32
      %s391 = smul.addr %s390, 8
      %s392 = scalar_lea.vmem %s1, %s391
      %p393 = pneg %p79
      %p394 = pneg %p76
      %p395 = scmp.lt.s32.totalorder %s25, 8
      %s396 = scalar_select %p395, %s25, 8
      %s397 = scalar_lea.vmem %s2, %s396
      %p398 = pneg %p105
      %p399 = pneg %p102
      %p400 = scmp.lt.s32.totalorder %s25, 8
      %s401 = scalar_select %p400, %s25, 8
      %s402 = smul.addr %s401, 16
      %s403 = smul.addr %s402, 8
      %s404 = scalar_lea.vmem %s3, %s403
      %p405 = pneg %p131
      %p406 = pneg %p128
      %p407 = scmp.lt.s32.totalorder %s25, 8
      %s408 = scalar_select %p407, %s25, 8
      %s409 = smul.addr %s408, 2
      %s410 = scalar_lea.vmem %s4, %s409
      %p411 = pneg %p157
      %p412 = pneg %p154
      %p413 = scmp.lt.s32.totalorder %s25, 8
      %s414 = scalar_select %p413, %s25, 8
      %s415 = smul.addr %s414, 128
      %s416 = smul.addr %s415, 8
      %s417 = scalar_lea.vmem %s5, %s416
      %p418 = pneg %p183
      %p419 = pneg %p180
      %p420 = scmp.lt.s32.totalorder %s25, 8
      %s421 = scalar_select %p420, %s25, 8
      %s422 = smul.addr %s421, 4
      %s423 = scalar_lea.vmem %s6, %s422
      %p424 = pneg %p209
      %p425 = pneg %p206
      %p426 = scmp.lt.s32.totalorder %s25, 8
      %s427 = scalar_select %p426, %s25, 8
      %s428 = smul.addr %s427, 64
      %s429 = smul.addr %s428, 8
      %s430 = scalar_lea.vmem %s7, %s429
      %p431 = pneg %p235
      %p432 = pneg %p232
      %p433 = scmp.lt.s32.totalorder %s25, 8
      %s434 = scalar_select %p433, %s25, 8
      %s435 = scalar_lea.vmem %s8, %s434
      %p436 = pneg %p261
      %p437 = pneg %p258
      %p438 = pneg %p289
      %p439 = pneg %p286
      %p440 = scmp.lt.s32.totalorder %s25, 8
      %s441 = scalar_select %p440, %s25, 8
      %p442 = scmp.lt.s32.totalorder %s24, 0
      %s443 = scalar_select %p442, %s24, 0
      %s444 = sadd.s32 %s443, %s441
      %s445 = smul.addr %s444, 8
      %s446 = scalar_lea.vmem %s9, %s445
      %p447 = scmp.lt.s32.totalorder %s24, 0
      %s448 = scalar_select %p447, %s24, 0
      %s449 = smul.addr %s448, 2
      %s450 = smul.addr %s449, 8
      %s451 = scalar_lea.vmem %s0, %s450
      %p452 = scmp.lt.s32.totalorder %s25, 8
      %s453 = scalar_select %p452, %s25, 8
      %s454 = smul.addr %s453, 32
      %s455 = smul.addr %s454, 8
      %s456 = scalar_lea.vmem %s1, %s455
      %p457 = scmp.lt.s32.totalorder %s25, 8
      %s458 = scalar_select %p457, %s25, 8
      %s459 = scalar_lea.vmem %s2, %s458
      %p460 = scmp.lt.s32.totalorder %s25, 8
      %s461 = scalar_select %p460, %s25, 8
      %s462 = smul.addr %s461, 16
      %s463 = smul.addr %s462, 8
      %s464 = scalar_lea.vmem %s3, %s463
      %p465 = scmp.lt.s32.totalorder %s25, 8
      %s466 = scalar_select %p465, %s25, 8
      %s467 = smul.addr %s466, 2
      %s468 = scalar_lea.vmem %s4, %s467
      %p469 = scmp.lt.s32.totalorder %s25, 8
      %s470 = scalar_select %p469, %s25, 8
      %s471 = smul.addr %s470, 128
      %s472 = smul.addr %s471, 8
      %s473 = scalar_lea.vmem %s5, %s472
      %p474 = scmp.lt.s32.totalorder %s25, 8
      %s475 = scalar_select %p474, %s25, 8
      %s476 = smul.addr %s475, 4
      %s477 = scalar_lea.vmem %s6, %s476
      %p478 = scmp.lt.s32.totalorder %s25, 8
      %s479 = scalar_select %p478, %s25, 8
      %s480 = smul.addr %s479, 64
      %s481 = smul.addr %s480, 8
      %s482 = scalar_lea.vmem %s7, %s481
      %p483 = scmp.lt.s32.totalorder %s25, 8
      %s484 = scalar_select %p483, %s25, 8
      %s485 = scalar_lea.vmem %s8, %s484
      %p486 = scmp.lt.s32.totalorder %s25, 8
      %s487 = scalar_select %p486, %s25, 8
      %p488 = scmp.lt.s32.totalorder %s24, 0
      %s489 = scalar_select %p488, %s24, 0
      %s490 = sadd.s32 %s489, %s487
      %s491 = smul.addr %s490, 8
      %s492 = scalar_lea.vmem %s9, %s491
      %v493 = vld [vmem:[%s451] sm:$0xff]
      %v494 = vld [vmem:[%s451 + $0x8] sm:$0xff]
      %v495 = vld [vmem:[%s456] sm:$0xff]
      %v496 = vld [vmem:[%s456 + $0x8] sm:$0xff]
      %v497 = vld [vmem:[%s456 + $0x10] sm:$0xff]
      %v498 = vld [vmem:[%s456 + $0x18] sm:$0xff]
      %v499 = vld [vmem:[%s456 + $0x20] sm:$0xff]
      %v500 = vld [vmem:[%s456 + $0x28] sm:$0xff]
      %v501 = vld [vmem:[%s456 + $0x30] sm:$0xff]
      %v502 = vld [vmem:[%s456 + $0x38] sm:$0xff]
      %v503 = vld [vmem:[%s456 + $0x40] sm:$0xff]
      %v504 = vld [vmem:[%s456 + $0x48] sm:$0xff]
      %v505 = vld [vmem:[%s456 + $0x50] sm:$0xff]
      %v506 = vld [vmem:[%s456 + $0x58] sm:$0xff]
      %v507 = vld [vmem:[%s456 + $0x60] sm:$0xff]
      %v508 = vld [vmem:[%s456 + $0x68] sm:$0xff]
      %v509 = vld [vmem:[%s456 + $0x70] sm:$0xff]
      %v510 = vld [vmem:[%s456 + $0x78] sm:$0xff]
      %v511 = vld [vmem:[%s456 + $0x80] sm:$0xff]
      %v512 = vld [vmem:[%s456 + $0x88] sm:$0xff]
      %v513 = vld [vmem:[%s456 + $0x90] sm:$0xff]
      %v514 = vld [vmem:[%s456 + $0x98] sm:$0xff]
      %v515 = vld [vmem:[%s456 + $0xa0] sm:$0xff]
      %v516 = vld [vmem:[%s456 + $0xa8] sm:$0xff]
      %v517 = vld [vmem:[%s456 + $0xb0] sm:$0xff]
      %v518 = vld [vmem:[%s456 + $0xb8] sm:$0xff]
      %v519 = vld [vmem:[%s456 + $0xc0] sm:$0xff]
      %v520 = vld [vmem:[%s456 + $0xc8] sm:$0xff]
      %v521 = vld [vmem:[%s456 + $0xd0] sm:$0xff]
      %v522 = vld [vmem:[%s456 + $0xd8] sm:$0xff]
      %v523 = vld [vmem:[%s456 + $0xe0] sm:$0xff]
      %v524 = vld [vmem:[%s456 + $0xe8] sm:$0xff]
      %v525 = vld [vmem:[%s456 + $0xf0] sm:$0xff]
      %v526 = vld [vmem:[%s456 + $0xf8] sm:$0xff]
      %v527 = vld [vmem:[%s459] sm:$0x1]
      %v529 = vperm.slane %v527, 0
      %531 = vmatpush.msra.mxu0 %v510
      %532 = vmatpush.msra.mxu0 %v509
      %533 = vmatpush.msra.mxu0 %v508
      %534 = vmatpush.msra.mxu0 %v507
      %535 = vmatpush.msra.mxu0 %v506
      %536 = vmatpush.msra.mxu0 %v505
      %537 = vmatpush.msra.mxu0 %v504
      %538 = vmatpush.msra.mxu0 %v503
      %539 = vmatpush.msra.mxu0 %v502
      %540 = vmatpush.msra.mxu0 %v501
      %541 = vmatpush.msra.mxu0 %v500
      %542 = vmatpush.msra.mxu0 %v499
      %543 = vmatpush.msra.mxu0 %v498
      %544 = vmatpush.msra.mxu0 %v497
      %545 = vmatpush.msra.mxu0 %v496
      %546 = vmatpush.msra.mxu0 %v495
      %547 = vmatmul.f32.gmra.mxu0 %v493
      %v548 = vpop.f32.mrf.mxu0
      %v549 = vadd.f32 %v529, %v548
      %550 = vdwg.mxu0
      %551 = vmatpush.msra.mxu0 %v526
      %552 = vmatpush.msra.mxu0 %v525
      %553 = vmatpush.msra.mxu0 %v524
      %554 = vmatpush.msra.mxu0 %v523
      %555 = vmatpush.msra.mxu0 %v522
      %556 = vmatpush.msra.mxu0 %v521
      %557 = vmatpush.msra.mxu0 %v520
      %558 = vmatpush.msra.mxu0 %v519
      %559 = vmatpush.msra.mxu0 %v518
      %560 = vmatpush.msra.mxu0 %v517
      %561 = vmatpush.msra.mxu0 %v516
      %562 = vmatpush.msra.mxu0 %v515
      %563 = vmatpush.msra.mxu0 %v514
      %564 = vmatpush.msra.mxu0 %v513
      %565 = vmatpush.msra.mxu0 %v512
      %566 = vmatpush.msra.mxu0 %v511
      %567 = vmatmul.f32.gmra.mxu0 %v494
      %v568 = vpop.f32.mrf.mxu0
      %v569 = vadd.f32 %v549, %v568
      %570 = vdwg.mxu0
      %v571 = vmul.f32 %v569, 0.5
      %v572 = vmul.f32 %v569, 0.70710677
      %v573 = vmul.f32 %v572, %v572
      %v574 = vmin.f32 16.0, %v573
      %v575 = vmul.f32 %v574, 2.1237322e-06
      %v576 = vadd.f32 %v575, 0.00028619796
      %v577 = vmul.f32 %v574, %v576
      %v578 = vadd.f32 %v577, 0.0036580483
      %v579 = vmul.f32 %v574, %v578
      %v580 = vadd.f32 %v579, 0.05243302
      %v581 = vmul.f32 %v574, %v580
      %v582 = vadd.f32 %v581, 0.18741608
      %v583 = vmul.f32 %v574, %v582
      %v584 = vadd.f32 %v583, 1.1283791
      %v585 = vmul.f32 %v572, %v584
      %v586 = vmul.f32 %v574, 3.8918573e-05
      %v587 = vadd.f32 %v586, 0.001143296
      %v588 = vmul.f32 %v574, %v587
      %v589 = vadd.f32 %v588, 0.014752088
      %v590 = vmul.f32 %v574, %v589
      %v591 = vadd.f32 %v590, 0.112945676
      %v592 = vmul.f32 %v574, %v591
      %v593 = vadd.f32 %v592, 0.4994258
      %v594 = vmul.f32 %v574, %v593
      %v595 = vadd.f32 %v594, 1.0
      %v596 = vrcp.pop %v595
      %v597 = vmul.f32 %v595, %v596
      %v598 = vsub.f32 1.0, %v597
      %v599 = vmul.f32 %v596, %v598
      %v600 = vadd.f32 %v596, %v599
      %vm601 = vweird.f32 %v595
      %vm602 = vweird.f32 %v596
      %vm603 = vmor %vm601, %vm602
      %v604 = vsel %vm603, %v596, %v600
      %v605 = vand.u32 2147483647, %v595
      %vm606 = vcmp.eq.f32.partialorder %v605, 8.507059e+37
      %v607 = vand.u32 %v595, 2147483648
      %v608 = vor.u32 1.1754944e-38, %v607
      %v609 = vsel %vm606, %v608, %v604
      %v610 = vmul.f32 %v585, %v609
      %v611 = vmin.f32 %v610, 1.0
      %v612 = vmax.f32 %v611, -1.0
      %v613 = vadd.f32 %v612, 1.0
      %v614 = vmul.f32 %v571, %v613
      %v615 = vld [vmem:[%s464] sm:$0xff]
      %v616 = vld [vmem:[%s464 + $0x8] sm:$0xff]
      %v617 = vld [vmem:[%s464 + $0x10] sm:$0xff]
      %v618 = vld [vmem:[%s464 + $0x18] sm:$0xff]
      %v619 = vld [vmem:[%s464 + $0x20] sm:$0xff]
      %v620 = vld [vmem:[%s464 + $0x28] sm:$0xff]
      %v621 = vld [vmem:[%s464 + $0x30] sm:$0xff]
      %v622 = vld [vmem:[%s464 + $0x38] sm:$0xff]
      %v623 = vld [vmem:[%s464 + $0x40] sm:$0xff]
      %v624 = vld [vmem:[%s464 + $0x48] sm:$0xff]
      %v625 = vld [vmem:[%s464 + $0x50] sm:$0xff]
      %v626 = vld [vmem:[%s464 + $0x58] sm:$0xff]
      %v627 = vld [vmem:[%s464 + $0x60] sm:$0xff]
      %v628 = vld [vmem:[%s464 + $0x68] sm:$0xff]
      %v629 = vld [vmem:[%s464 + $0x70] sm:$0xff]
      %v630 = vld [vmem:[%s464 + $0x78] sm:$0xff]
      %v631 = vld [vmem:[%s468] sm:$0x3]
      %v633 = vperm.slane %v631, 0
      %v634 = vperm.slane %v631, 1
      %vm637 = vcmask 523264
      %v639 = vsel %vm637, %v614, 0
      %641 = vmatpush.msra.mxu0 0.0
      %642 = vmatpush.msra.mxu0 0.0
      %643 = vmatpush.msra.mxu0 0.0
      %644 = vmatpush.msra.mxu0 0.0
      %645 = vmatpush.msra.mxu0 0.0
      %646 = vmatpush.msra.mxu0 0.0
      %647 = vmatpush.msra.mxu0 0.0
      %648 = vmatpush.msra.mxu0 0.0
      %649 = vmatpush.msra.mxu0 %v629
      %650 = vmatpush.msra.mxu0 %v627
      %651 = vmatpush.msra.mxu0 %v625
      %652 = vmatpush.msra.mxu0 %v623
      %653 = vmatpush.msra.mxu0 %v621
      %654 = vmatpush.msra.mxu0 %v619
      %655 = vmatpush.msra.mxu0 %v617
      %656 = vmatpush.msra.mxu0 %v615
      %657 = vmatmul.f32.gmra.mxu0 %v639
      %v658 = vpop.f32.mrf.mxu0
      %v659 = vadd.f32 %v633, %v658
      %660 = vdwg.mxu0
      %661 = vmatpush.msra.mxu0 0.0
      %662 = vmatpush.msra.mxu0 0.0
      %663 = vmatpush.msra.mxu0 0.0
      %664 = vmatpush.msra.mxu0 0.0
      %665 = vmatpush.msra.mxu0 0.0
      %666 = vmatpush.msra.mxu0 0.0
      %667 = vmatpush.msra.mxu0 0.0
      %668 = vmatpush.msra.mxu0 0.0
      %669 = vmatpush.msra.mxu0 %v630
      %670 = vmatpush.msra.mxu0 %v628
      %671 = vmatpush.msra.mxu0 %v626
      %672 = vmatpush.msra.mxu0 %v624
      %673 = vmatpush.msra.mxu0 %v622
      %674 = vmatpush.msra.mxu0 %v620
      %675 = vmatpush.msra.mxu0 %v618
      %676 = vmatpush.msra.mxu0 %v616
      %677 = vmatmul.f32.gmra.mxu0 %v639
      %v678 = vpop.f32.mrf.mxu0
      %v679 = vadd.f32 %v634, %v678
      %680 = vdwg.mxu0
      %v681 = vadd.f32 %v493, %v659
      %v682 = vadd.f32 %v494, %v679
      %v683 = vld [vmem:[%s473] sm:$0xff]
      %v684 = vld [vmem:[%s473 + $0x8] sm:$0xff]
      %v685 = vld [vmem:[%s473 + $0x10] sm:$0xff]
      %v686 = vld [vmem:[%s473 + $0x18] sm:$0xff]
      %v687 = vld [vmem:[%s473 + $0x20] sm:$0xff]
      %v688 = vld [vmem:[%s473 + $0x28] sm:$0xff]
      %v689 = vld [vmem:[%s473 + $0x30] sm:$0xff]
      %v690 = vld [vmem:[%s473 + $0x38] sm:$0xff]
      %v691 = vld [vmem:[%s473 + $0x40] sm:$0xff]
      %v692 = vld [vmem:[%s473 + $0x48] sm:$0xff]
      %v693 = vld [vmem:[%s473 + $0x50] sm:$0xff]
      %v694 = vld [vmem:[%s473 + $0x58] sm:$0xff]
      %v695 = vld [vmem:[%s473 + $0x60] sm:$0xff]
      %v696 = vld [vmem:[%s473 + $0x68] sm:$0xff]
      %v697 = vld [vmem:[%s473 + $0x70] sm:$0xff]
      %v698 = vld [vmem:[%s473 + $0x78] sm:$0xff]
      %v699 = vld [vmem:[%s473 + $0x80] sm:$0xff]
      %v700 = vld [vmem:[%s473 + $0x88] sm:$0xff]
      %v701 = vld [vmem:[%s473 + $0x90] sm:$0xff]
      %v702 = vld [vmem:[%s473 + $0x98] sm:$0xff]
      %v703 = vld [vmem:[%s473 + $0xa0] sm:$0xff]
      %v704 = vld [vmem:[%s473 + $0xa8] sm:$0xff]
      %v705 = vld [vmem:[%s473 + $0xb0] sm:$0xff]
      %v706 = vld [vmem:[%s473 + $0xb8] sm:$0xff]
      %v707 = vld [vmem:[%s473 + $0xc0] sm:$0xff]
      %v708 = vld [vmem:[%s473 + $0xc8] sm:$0xff]
      %v709 = vld [vmem:[%s473 + $0xd0] sm:$0xff]
      %v710 = vld [vmem:[%s473 + $0xd8] sm:$0xff]
      %v711 = vld [vmem:[%s473 + $0xe0] sm:$0xff]
      %v712 = vld [vmem:[%s473 + $0xe8] sm:$0xff]
      %v713 = vld [vmem:[%s473 + $0xf0] sm:$0xff]
      %v714 = vld [vmem:[%s473 + $0xf8] sm:$0xff]
      %v715 = vld [vmem:[%s473 + $0x100] sm:$0xff]
      %v716 = vld [vmem:[%s473 + $0x108] sm:$0xff]
      %v717 = vld [vmem:[%s473 + $0x110] sm:$0xff]
      %v718 = vld [vmem:[%s473 + $0x118] sm:$0xff]
      %v719 = vld [vmem:[%s473 + $0x120] sm:$0xff]
      %v720 = vld [vmem:[%s473 + $0x128] sm:$0xff]
      %v721 = vld [vmem:[%s473 + $0x130] sm:$0xff]
      %v722 = vld [vmem:[%s473 + $0x138] sm:$0xff]
      %v723 = vld [vmem:[%s473 + $0x140] sm:$0xff]
      %v724 = vld [vmem:[%s473 + $0x148] sm:$0xff]
      %v725 = vld [vmem:[%s473 + $0x150] sm:$0xff]
      %v726 = vld [vmem:[%s473 + $0x158] sm:$0xff]
      %v727 = vld [vmem:[%s473 + $0x160] sm:$0xff]
      %v728 = vld [vmem:[%s473 + $0x168] sm:$0xff]
      %v729 = vld [vmem:[%s473 + $0x170] sm:$0xff]
      %v730 = vld [vmem:[%s473 + $0x178] sm:$0xff]
      %v731 = vld [vmem:[%s473 + $0x180] sm:$0xff]
      %v732 = vld [vmem:[%s473 + $0x188] sm:$0xff]
      %v733 = vld [vmem:[%s473 + $0x190] sm:$0xff]
      %v734 = vld [vmem:[%s473 + $0x198] sm:$0xff]
      %v735 = vld [vmem:[%s473 + $0x1a0] sm:$0xff]
      %v736 = vld [vmem:[%s473 + $0x1a8] sm:$0xff]
      %v737 = vld [vmem:[%s473 + $0x1b0] sm:$0xff]
      %v738 = vld [vmem:[%s473 + $0x1b8] sm:$0xff]
      %v739 = vld [vmem:[%s473 + $0x1c0] sm:$0xff]
      %v740 = vld [vmem:[%s473 + $0x1c8] sm:$0xff]
      %v741 = vld [vmem:[%s473 + $0x1d0] sm:$0xff]
      %v742 = vld [vmem:[%s473 + $0x1d8] sm:$0xff]
      %v743 = vld [vmem:[%s473 + $0x1e0] sm:$0xff]
      %v744 = vld [vmem:[%s473 + $0x1e8] sm:$0xff]
      %v745 = vld [vmem:[%s473 + $0x1f0] sm:$0xff]
      %v746 = vld [vmem:[%s473 + $0x1f8] sm:$0xff]
      %v747 = vld [vmem:[%s473 + $0x200] sm:$0xff]
      %v748 = vld [vmem:[%s473 + $0x208] sm:$0xff]
      %v749 = vld [vmem:[%s473 + $0x210] sm:$0xff]
      %v750 = vld [vmem:[%s473 + $0x218] sm:$0xff]
      %v751 = vld [vmem:[%s473 + $0x220] sm:$0xff]
      %v752 = vld [vmem:[%s473 + $0x228] sm:$0xff]
      %v753 = vld [vmem:[%s473 + $0x230] sm:$0xff]
      %v754 = vld [vmem:[%s473 + $0x238] sm:$0xff]
      %v755 = vld [vmem:[%s473 + $0x240] sm:$0xff]
      %v756 = vld [vmem:[%s473 + $0x248] sm:$0xff]
      %v757 = vld [vmem:[%s473 + $0x250] sm:$0xff]
      %v758 = vld [vmem:[%s473 + $0x258] sm:$0xff]
      %v759 = vld [vmem:[%s473 + $0x260] sm:$0xff]
      %v760 = vld [vmem:[%s473 + $0x268] sm:$0xff]
      %v761 = vld [vmem:[%s473 + $0x270] sm:$0xff]
      %v762 = vld [vmem:[%s473 + $0x278] sm:$0xff]
      %v763 = vld [vmem:[%s473 + $0x280] sm:$0xff]
      %v764 = vld [vmem:[%s473 + $0x288] sm:$0xff]
      %v765 = vld [vmem:[%s473 + $0x290] sm:$0xff]
      %v766 = vld [vmem:[%s473 + $0x298] sm:$0xff]
      %v767 = vld [vmem:[%s473 + $0x2a0] sm:$0xff]
      %v768 = vld [vmem:[%s473 + $0x2a8] sm:$0xff]
      %v769 = vld [vmem:[%s473 + $0x2b0] sm:$0xff]
      %v770 = vld [vmem:[%s473 + $0x2b8] sm:$0xff]
      %v771 = vld [vmem:[%s473 + $0x2c0] sm:$0xff]
      %v772 = vld [vmem:[%s473 + $0x2c8] sm:$0xff]
      %v773 = vld [vmem:[%s473 + $0x2d0] sm:$0xff]
      %v774 = vld [vmem:[%s473 + $0x2d8] sm:$0xff]
      %v775 = vld [vmem:[%s473 + $0x2e0] sm:$0xff]
      %v776 = vld [vmem:[%s473 + $0x2e8] sm:$0xff]
      %v777 = vld [vmem:[%s473 + $0x2f0] sm:$0xff]
      %v778 = vld [vmem:[%s473 + $0x2f8] sm:$0xff]
      %v779 = vld [vmem:[%s473 + $0x300] sm:$0xff]
      %v780 = vld [vmem:[%s473 + $0x308] sm:$0xff]
      %v781 = vld [vmem:[%s473 + $0x310] sm:$0xff]
      %v782 = vld [vmem:[%s473 + $0x318] sm:$0xff]
      %v783 = vld [vmem:[%s473 + $0x320] sm:$0xff]
      %v784 = vld [vmem:[%s473 + $0x328] sm:$0xff]
      %v785 = vld [vmem:[%s473 + $0x330] sm:$0xff]
      %v786 = vld [vmem:[%s473 + $0x338] sm:$0xff]
      %v787 = vld [vmem:[%s473 + $0x340] sm:$0xff]
      %v788 = vld [vmem:[%s473 + $0x348] sm:$0xff]
      %v789 = vld [vmem:[%s473 + $0x350] sm:$0xff]
      %v790 = vld [vmem:[%s473 + $0x358] sm:$0xff]
      %v791 = vld [vmem:[%s473 + $0x360] sm:$0xff]
      %v792 = vld [vmem:[%s473 + $0x368] sm:$0xff]
      %v793 = vld [vmem:[%s473 + $0x370] sm:$0xff]
      %v794 = vld [vmem:[%s473 + $0x378] sm:$0xff]
      %v795 = vld [vmem:[%s473 + $0x380] sm:$0xff]
      %v796 = vld [vmem:[%s473 + $0x388] sm:$0xff]
      %v797 = vld [vmem:[%s473 + $0x390] sm:$0xff]
      %v798 = vld [vmem:[%s473 + $0x398] sm:$0xff]
      %v799 = vld [vmem:[%s473 + $0x3a0] sm:$0xff]
      %v800 = vld [vmem:[%s473 + $0x3a8] sm:$0xff]
      %v801 = vld [vmem:[%s473 + $0x3b0] sm:$0xff]
      %v802 = vld [vmem:[%s473 + $0x3b8] sm:$0xff]
      %v803 = vld [vmem:[%s473 + $0x3c0] sm:$0xff]
      %v804 = vld [vmem:[%s473 + $0x3c8] sm:$0xff]
      %v805 = vld [vmem:[%s473 + $0x3d0] sm:$0xff]
      %v806 = vld [vmem:[%s473 + $0x3d8] sm:$0xff]
      %v807 = vld [vmem:[%s473 + $0x3e0] sm:$0xff]
      %v808 = vld [vmem:[%s473 + $0x3e8] sm:$0xff]
      %v809 = vld [vmem:[%s473 + $0x3f0] sm:$0xff]
      %v810 = vld [vmem:[%s473 + $0x3f8] sm:$0xff]
      %v811 = vld [vmem:[%s477] sm:$0xf]
      %v813 = vperm.slane %v811, 0
      %v814 = vperm.slane %v811, 1
      %v815 = vperm.slane %v811, 2
      %v816 = vperm.slane %v811, 3
      %821 = vmatpush.msra.mxu0 %v743
      %822 = vmatpush.msra.mxu0 %v739
      %823 = vmatpush.msra.mxu0 %v735
      %824 = vmatpush.msra.mxu0 %v731
      %825 = vmatpush.msra.mxu0 %v727
      %826 = vmatpush.msra.mxu0 %v723
      %827 = vmatpush.msra.mxu0 %v719
      %828 = vmatpush.msra.mxu0 %v715
      %829 = vmatpush.msra.mxu0 %v711
      %830 = vmatpush.msra.mxu0 %v707
      %831 = vmatpush.msra.mxu0 %v703
      %832 = vmatpush.msra.mxu0 %v699
      %833 = vmatpush.msra.mxu0 %v695
      %834 = vmatpush.msra.mxu0 %v691
      %835 = vmatpush.msra.mxu0 %v687
      %836 = vmatpush.msra.mxu0 %v683
      %837 = vmatmul.f32.gmra.mxu0 %v681
      %v838 = vpop.f32.mrf.mxu0
      %v839 = vadd.f32 %v813, %v838
      %840 = vdwg.mxu0
      %841 = vmatpush.msra.mxu0 %v807
      %842 = vmatpush.msra.mxu0 %v803
      %843 = vmatpush.msra.mxu0 %v799
      %844 = vmatpush.msra.mxu0 %v795
      %845 = vmatpush.msra.mxu0 %v791
      %846 = vmatpush.msra.mxu0 %v787
      %847 = vmatpush.msra.mxu0 %v783
      %848 = vmatpush.msra.mxu0 %v779
      %849 = vmatpush.msra.mxu0 %v775
      %850 = vmatpush.msra.mxu0 %v771
      %851 = vmatpush.msra.mxu0 %v767
      %852 = vmatpush.msra.mxu0 %v763
      %853 = vmatpush.msra.mxu0 %v759
      %854 = vmatpush.msra.mxu0 %v755
      %855 = vmatpush.msra.mxu0 %v751
      %856 = vmatpush.msra.mxu0 %v747
      %857 = vmatmul.f32.gmra.mxu0 %v682
      %v858 = vpop.f32.mrf.mxu0
      %v859 = vadd.f32 %v839, %v858
      %860 = vdwg.mxu0
      %861 = vmatpush.msra.mxu0 %v744
      %862 = vmatpush.msra.mxu0 %v740
      %863 = vmatpush.msra.mxu0 %v736
      %864 = vmatpush.msra.mxu0 %v732
      %865 = vmatpush.msra.mxu0 %v728
      %866 = vmatpush.msra.mxu0 %v724
      %867 = vmatpush.msra.mxu0 %v720
      %868 = vmatpush.msra.mxu0 %v716
      %869 = vmatpush.msra.mxu0 %v712
      %870 = vmatpush.msra.mxu0 %v708
      %871 = vmatpush.msra.mxu0 %v704
      %872 = vmatpush.msra.mxu0 %v700
      %873 = vmatpush.msra.mxu0 %v696
      %874 = vmatpush.msra.mxu0 %v692
      %875 = vmatpush.msra.mxu0 %v688
      %876 = vmatpush.msra.mxu0 %v684
      %877 = vmatmul.f32.gmra.mxu0 %v681
      %v878 = vpop.f32.mrf.mxu0
      %v879 = vadd.f32 %v814, %v878
      %880 = vdwg.mxu0
      %881 = vmatpush.msra.mxu0 %v808
      %882 = vmatpush.msra.mxu0 %v804
      %883 = vmatpush.msra.mxu0 %v800
      %884 = vmatpush.msra.mxu0 %v796
      %885 = vmatpush.msra.mxu0 %v792
      %886 = vmatpush.msra.mxu0 %v788
      %887 = vmatpush.msra.mxu0 %v784
      %888 = vmatpush.msra.mxu0 %v780
      %889 = vmatpush.msra.mxu0 %v776
      %890 = vmatpush.msra.mxu0 %v772
      %891 = vmatpush.msra.mxu0 %v768
      %892 = vmatpush.msra.mxu0 %v764
      %893 = vmatpush.msra.mxu0 %v760
      %894 = vmatpush.msra.mxu0 %v756
      %895 = vmatpush.msra.mxu0 %v752
      %896 = vmatpush.msra.mxu0 %v748
      %897 = vmatmul.f32.gmra.mxu0 %v682
      %v898 = vpop.f32.mrf.mxu0
      %v899 = vadd.f32 %v879, %v898
      %900 = vdwg.mxu0
      %901 = vmatpush.msra.mxu0 %v745
      %902 = vmatpush.msra.mxu0 %v741
      %903 = vmatpush.msra.mxu0 %v737
      %904 = vmatpush.msra.mxu0 %v733
      %905 = vmatpush.msra.mxu0 %v729
      %906 = vmatpush.msra.mxu0 %v725
      %907 = vmatpush.msra.mxu0 %v721
      %908 = vmatpush.msra.mxu0 %v717
      %909 = vmatpush.msra.mxu0 %v713
      %910 = vmatpush.msra.mxu0 %v709
      %911 = vmatpush.msra.mxu0 %v705
      %912 = vmatpush.msra.mxu0 %v701
      %913 = vmatpush.msra.mxu0 %v697
      %914 = vmatpush.msra.mxu0 %v693
      %915 = vmatpush.msra.mxu0 %v689
      %916 = vmatpush.msra.mxu0 %v685
      %917 = vmatmul.f32.gmra.mxu0 %v681
      %v918 = vpop.f32.mrf.mxu0
      %v919 = vadd.f32 %v815, %v918
      %920 = vdwg.mxu0
      %921 = vmatpush.msra.mxu0 %v809
      %922 = vmatpush.msra.mxu0 %v805
      %923 = vmatpush.msra.mxu0 %v801
      %924 = vmatpush.msra.mxu0 %v797
      %925 = vmatpush.msra.mxu0 %v793
      %926 = vmatpush.msra.mxu0 %v789
      %927 = vmatpush.msra.mxu0 %v785
      %928 = vmatpush.msra.mxu0 %v781
      %929 = vmatpush.msra.mxu0 %v777
      %930 = vmatpush.msra.mxu0 %v773
      %931 = vmatpush.msra.mxu0 %v769
      %932 = vmatpush.msra.mxu0 %v765
      %933 = vmatpush.msra.mxu0 %v761
      %934 = vmatpush.msra.mxu0 %v757
      %935 = vmatpush.msra.mxu0 %v753
      %936 = vmatpush.msra.mxu0 %v749
      %937 = vmatmul.f32.gmra.mxu0 %v682
      %v938 = vpop.f32.mrf.mxu0
      %v939 = vadd.f32 %v919, %v938
      %940 = vdwg.mxu0
      %941 = vmatpush.msra.mxu0 %v746
      %942 = vmatpush.msra.mxu0 %v742
      %943 = vmatpush.msra.mxu0 %v738
      %944 = vmatpush.msra.mxu0 %v734
      %945 = vmatpush.msra.mxu0 %v730
      %946 = vmatpush.msra.mxu0 %v726
      %947 = vmatpush.msra.mxu0 %v722
      %948 = vmatpush.msra.mxu0 %v718
      %949 = vmatpush.msra.mxu0 %v714
      %950 = vmatpush.msra.mxu0 %v710
      %951 = vmatpush.msra.mxu0 %v706
      %952 = vmatpush.msra.mxu0 %v702
      %953 = vmatpush.msra.mxu0 %v698
      %954 = vmatpush.msra.mxu0 %v694
      %955 = vmatpush.msra.mxu0 %v690
      %956 = vmatpush.msra.mxu0 %v686
      %957 = vmatmul.f32.gmra.mxu0 %v681
      %v958 = vpop.f32.mrf.mxu0
      %v959 = vadd.f32 %v816, %v958
      %960 = vdwg.mxu0
      %961 = vmatpush.msra.mxu0 %v810
      %962 = vmatpush.msra.mxu0 %v806
      %963 = vmatpush.msra.mxu0 %v802
      %964 = vmatpush.msra.mxu0 %v798
      %965 = vmatpush.msra.mxu0 %v794
      %966 = vmatpush.msra.mxu0 %v790
      %967 = vmatpush.msra.mxu0 %v786
      %968 = vmatpush.msra.mxu0 %v782
      %969 = vmatpush.msra.mxu0 %v778
      %970 = vmatpush.msra.mxu0 %v774
      %971 = vmatpush.msra.mxu0 %v770
      %972 = vmatpush.msra.mxu0 %v766
      %973 = vmatpush.msra.mxu0 %v762
      %974 = vmatpush.msra.mxu0 %v758
      %975 = vmatpush.msra.mxu0 %v754
      %976 = vmatpush.msra.mxu0 %v750
      %977 = vmatmul.f32.gmra.mxu0 %v682
      %v978 = vpop.f32.mrf.mxu0
      %v979 = vadd.f32 %v959, %v978
      %980 = vdwg.mxu0
      %v981 = vmax.f32 %v859, 0.0
      %v982 = vmax.f32 %v899, 0.0
      %v983 = vmax.f32 %v939, 0.0
      %v984 = vmax.f32 %v979, 0.0
      %v985 = vld [vmem:[%s482] sm:$0xff]
      %v986 = vld [vmem:[%s482 + $0x8] sm:$0xff]
      %v987 = vld [vmem:[%s482 + $0x10] sm:$0xff]
      %v988 = vld [vmem:[%s482 + $0x18] sm:$0xff]
      %v989 = vld [vmem:[%s482 + $0x20] sm:$0xff]
      %v990 = vld [vmem:[%s482 + $0x28] sm:$0xff]
      %v991 = vld [vmem:[%s482 + $0x30] sm:$0xff]
      %v992 = vld [vmem:[%s482 + $0x38] sm:$0xff]
      %v993 = vld [vmem:[%s482 + $0x40] sm:$0xff]
      %v994 = vld [vmem:[%s482 + $0x48] sm:$0xff]
      %v995 = vld [vmem:[%s482 + $0x50] sm:$0xff]
      %v996 = vld [vmem:[%s482 + $0x58] sm:$0xff]
      %v997 = vld [vmem:[%s482 + $0x60] sm:$0xff]
      %v998 = vld [vmem:[%s482 + $0x68] sm:$0xff]
      %v999 = vld [vmem:[%s482 + $0x70] sm:$0xff]
      %v1000 = vld [vmem:[%s482 + $0x78] sm:$0xff]
      %v1001 = vld [vmem:[%s482 + $0x80] sm:$0xff]
      %v1002 = vld [vmem:[%s482 + $0x88] sm:$0xff]
      %v1003 = vld [vmem:[%s482 + $0x90] sm:$0xff]
      %v1004 = vld [vmem:[%s482 + $0x98] sm:$0xff]
      %v1005 = vld [vmem:[%s482 + $0xa0] sm:$0xff]
      %v1006 = vld [vmem:[%s482 + $0xa8] sm:$0xff]
      %v1007 = vld [vmem:[%s482 + $0xb0] sm:$0xff]
      %v1008 = vld [vmem:[%s482 + $0xb8] sm:$0xff]
      %v1009 = vld [vmem:[%s482 + $0xc0] sm:$0xff]
      %v1010 = vld [vmem:[%s482 + $0xc8] sm:$0xff]
      %v1011 = vld [vmem:[%s482 + $0xd0] sm:$0xff]
      %v1012 = vld [vmem:[%s482 + $0xd8] sm:$0xff]
      %v1013 = vld [vmem:[%s482 + $0xe0] sm:$0xff]
      %v1014 = vld [vmem:[%s482 + $0xe8] sm:$0xff]
      %v1015 = vld [vmem:[%s482 + $0xf0] sm:$0xff]
      %v1016 = vld [vmem:[%s482 + $0xf8] sm:$0xff]
      %v1017 = vld [vmem:[%s482 + $0x100] sm:$0xff]
      %v1018 = vld [vmem:[%s482 + $0x108] sm:$0xff]
      %v1019 = vld [vmem:[%s482 + $0x110] sm:$0xff]
      %v1020 = vld [vmem:[%s482 + $0x118] sm:$0xff]
      %v1021 = vld [vmem:[%s482 + $0x120] sm:$0xff]
      %v1022 = vld [vmem:[%s482 + $0x128] sm:$0xff]
      %v1023 = vld [vmem:[%s482 + $0x130] sm:$0xff]
      %v1024 = vld [vmem:[%s482 + $0x138] sm:$0xff]
      %v1025 = vld [vmem:[%s482 + $0x140] sm:$0xff]
      %v1026 = vld [vmem:[%s482 + $0x148] sm:$0xff]
      %v1027 = vld [vmem:[%s482 + $0x150] sm:$0xff]
      %v1028 = vld [vmem:[%s482 + $0x158] sm:$0xff]
      %v1029 = vld [vmem:[%s482 + $0x160] sm:$0xff]
      %v1030 = vld [vmem:[%s482 + $0x168] sm:$0xff]
      %v1031 = vld [vmem:[%s482 + $0x170] sm:$0xff]
      %v1032 = vld [vmem:[%s482 + $0x178] sm:$0xff]
      %v1033 = vld [vmem:[%s482 + $0x180] sm:$0xff]
      %v1034 = vld [vmem:[%s482 + $0x188] sm:$0xff]
      %v1035 = vld [vmem:[%s482 + $0x190] sm:$0xff]
      %v1036 = vld [vmem:[%s482 + $0x198] sm:$0xff]
      %v1037 = vld [vmem:[%s482 + $0x1a0] sm:$0xff]
      %v1038 = vld [vmem:[%s482 + $0x1a8] sm:$0xff]
      %v1039 = vld [vmem:[%s482 + $0x1b0] sm:$0xff]
      %v1040 = vld [vmem:[%s482 + $0x1b8] sm:$0xff]
      %v1041 = vld [vmem:[%s482 + $0x1c0] sm:$0xff]
      %v1042 = vld [vmem:[%s482 + $0x1c8] sm:$0xff]
      %v1043 = vld [vmem:[%s482 + $0x1d0] sm:$0xff]
      %v1044 = vld [vmem:[%s482 + $0x1d8] sm:$0xff]
      %v1045 = vld [vmem:[%s482 + $0x1e0] sm:$0xff]
      %v1046 = vld [vmem:[%s482 + $0x1e8] sm:$0xff]
      %v1047 = vld [vmem:[%s482 + $0x1f0] sm:$0xff]
      %v1048 = vld [vmem:[%s482 + $0x1f8] sm:$0xff]
      %v1049 = vld [vmem:[%s485] sm:$0x1]
      %v1051 = vperm.slane %v1049, 0
      %1053 = vmatpush.msra.mxu0 %v1000
      %1054 = vmatpush.msra.mxu0 %v999
      %1055 = vmatpush.msra.mxu0 %v998
      %1056 = vmatpush.msra.mxu0 %v997
      %1057 = vmatpush.msra.mxu0 %v996
      %1058 = vmatpush.msra.mxu0 %v995
      %1059 = vmatpush.msra.mxu0 %v994
      %1060 = vmatpush.msra.mxu0 %v993
      %1061 = vmatpush.msra.mxu0 %v992
      %1062 = vmatpush.msra.mxu0 %v991
      %1063 = vmatpush.msra.mxu0 %v990
      %1064 = vmatpush.msra.mxu0 %v989
      %1065 = vmatpush.msra.mxu0 %v988
      %1066 = vmatpush.msra.mxu0 %v987
      %1067 = vmatpush.msra.mxu0 %v986
      %1068 = vmatpush.msra.mxu0 %v985
      %1069 = vmatmul.f32.gmra.mxu0 %v981
      %v1070 = vpop.f32.mrf.mxu0
      %v1071 = vadd.f32 %v1051, %v1070
      %1072 = vdwg.mxu0
      %1073 = vmatpush.msra.mxu0 %v1016
      %1074 = vmatpush.msra.mxu0 %v1015
      %1075 = vmatpush.msra.mxu0 %v1014
      %1076 = vmatpush.msra.mxu0 %v1013
      %1077 = vmatpush.msra.mxu0 %v1012
      %1078 = vmatpush.msra.mxu0 %v1011
      %1079 = vmatpush.msra.mxu0 %v1010
      %1080 = vmatpush.msra.mxu0 %v1009
      %1081 = vmatpush.msra.mxu0 %v1008
      %1082 = vmatpush.msra.mxu0 %v1007
      %1083 = vmatpush.msra.mxu0 %v1006
      %1084 = vmatpush.msra.mxu0 %v1005
      %1085 = vmatpush.msra.mxu0 %v1004
      %1086 = vmatpush.msra.mxu0 %v1003
      %1087 = vmatpush.msra.mxu0 %v1002
      %1088 = vmatpush.msra.mxu0 %v1001
      %1089 = vmatmul.f32.gmra.mxu0 %v982
      %v1090 = vpop.f32.mrf.mxu0
      %v1091 = vadd.f32 %v1071, %v1090
      %1092 = vdwg.mxu0
      %1093 = vmatpush.msra.mxu0 %v1032
      %1094 = vmatpush.msra.mxu0 %v1031
      %1095 = vmatpush.msra.mxu0 %v1030
      %1096 = vmatpush.msra.mxu0 %v1029
      %1097 = vmatpush.msra.mxu0 %v1028
      %1098 = vmatpush.msra.mxu0 %v1027
      %1099 = vmatpush.msra.mxu0 %v1026
      %1100 = vmatpush.msra.mxu0 %v1025
      %1101 = vmatpush.msra.mxu0 %v1024
      %1102 = vmatpush.msra.mxu0 %v1023
      %1103 = vmatpush.msra.mxu0 %v1022
      %1104 = vmatpush.msra.mxu0 %v1021
      %1105 = vmatpush.msra.mxu0 %v1020
      %1106 = vmatpush.msra.mxu0 %v1019
      %1107 = vmatpush.msra.mxu0 %v1018
      %1108 = vmatpush.msra.mxu0 %v1017
      %1109 = vmatmul.f32.gmra.mxu0 %v983
      %v1110 = vpop.f32.mrf.mxu0
      %v1111 = vadd.f32 %v1091, %v1110
      %1112 = vdwg.mxu0
      %1113 = vmatpush.msra.mxu0 %v1048
      %1114 = vmatpush.msra.mxu0 %v1047
      %1115 = vmatpush.msra.mxu0 %v1046
      %1116 = vmatpush.msra.mxu0 %v1045
      %1117 = vmatpush.msra.mxu0 %v1044
      %1118 = vmatpush.msra.mxu0 %v1043
      %1119 = vmatpush.msra.mxu0 %v1042
      %1120 = vmatpush.msra.mxu0 %v1041
      %1121 = vmatpush.msra.mxu0 %v1040
      %1122 = vmatpush.msra.mxu0 %v1039
      %1123 = vmatpush.msra.mxu0 %v1038
      %1124 = vmatpush.msra.mxu0 %v1037
      %1125 = vmatpush.msra.mxu0 %v1036
      %1126 = vmatpush.msra.mxu0 %v1035
      %1127 = vmatpush.msra.mxu0 %v1034
      %1128 = vmatpush.msra.mxu0 %v1033
      %1129 = vmatmul.f32.gmra.mxu0 %v984
      %v1130 = vpop.f32.mrf.mxu0
      %v1131 = vadd.f32 %v1111, %v1130
      %1132 = vdwg.mxu0
      %1133 = vst [vmem:[%s492] sm:$0xff] %v1131
      %p1134 = scmp.lt.s32.totalorder %s25, 8
      %s1135 = scalar_select %p1134, %s25, 8
      %p1136 = scmp.lt.s32.totalorder %s24, 0
      %s1137 = scalar_select %p1136, %s24, 0
      %s1138 = sadd.s32 %s1137, %s1135
      %s1139 = smul.addr %s1138, 8
      %s1140 = scalar_lea.vmem %s9, %s1139
      // Predicated region
      $region57: #{multi_attr_pred_head_forward.1} parent=55 // pred_check
        %p1141 = pneg %p286
      $region58: #{multi_attr_pred_head_forward.1} parent=55 // pred_check_branch
        %1143 = sbr.rel (%p1141) target = $region60
      $region59: #{multi_attr_pred_head_forward.1} parent=55 // pred_region
        _
      $region60: #{multi_attr_pred_head_forward.1} parent=55 // pred_fallthru
        _
    $region56: #{multi_attr_pred_head_forward.1} parent=5 // pred_fallthru
      _
    %p1144 = scmp.le.s32.totalorder 2, %s15
    // Predicated region
    $region61: #{multi_attr_pred_head_forward.1} parent=5 // pred_check
      %p1145 = pneg %p1144
    $region62: #{multi_attr_pred_head_forward.1} parent=5 // pred_check_branch
      %1147 = sbr.rel (%p1145) target = $region64
    $region63: #{multi_attr_pred_head_forward.1} parent=5 // pred_region
      %s1148 = ssub.s32 %s15, 2
      // Predicated region
      $region65: #{multi_attr_pred_head_forward.1} parent=63 // pred_check
        %p1149 = pneg %p292
      $region66: #{multi_attr_pred_head_forward.1} parent=63 // pred_check_branch
        %1151 = sbr.rel (%p1149) target = $region68
      $region67: #{multi_attr_pred_head_forward.1} parent=63 // pred_region
        %p1152 = scmp.lt.s32.totalorder %s27, 8
        %s1153 = scalar_select %p1152, %s27, 8
        %p1154 = scmp.lt.s32.totalorder %s26, 0
        %s1155 = scalar_select %p1154, %s26, 0
        %s1156 = sadd.s32 %s1155, %s1153
        %s1157 = smul.addr %s1156, 8
        %s1158 = scalar_lea.vmem %s9, %s1157
      $region68: #{multi_attr_pred_head_forward.1} parent=63 // pred_fallthru
        _
    $region64: #{multi_attr_pred_head_forward.1} parent=5 // pred_fallthru
      _
  $region6: #{multi_attr_pred_head_forward.1} parent=0 // loop_footer
    %s19 = sadd.s32 1, %s15
  $region7: #{multi_attr_pred_head_forward.1} parent=0 // loop_footer_branch
    %14 = sbr.rel target = $region3
  $region8: #{multi_attr_pred_head_forward.1} parent=0 // loop_exit
    _

</llo_original>
